<compile_context>
chip_gen: v6e
topology: v6e:2x2x1
jax: 0.10.0
libtpu: 0.0.40
codegen_flags: <defaults>
</compile_context>

<pallas_src>
from typing import NamedTuple

import jax
import jax.numpy as jnp
from jax import lax
from jax.experimental import pallas as pl
from jax.experimental.pallas import tpu as pltpu

NUM_CLASSES = 50

# Safe on every generation: well below v7x's 64 MiB physical VMEM, and our
# default tiles use ~10-16 MiB with double buffering, so there is ample
# headroom (v5e/v6e could go higher, but gain nothing at these tile sizes).
_VMEM_LIMIT = 48 * 1024 * 1024

# Default tile targets (divisor-snapped per call).  tn=512 means typical Fout
# layers stream the weight matrix from HBM exactly once per M tile; tk=1024
# keeps the K loop short.
_TM, _TN, _TK = 512, 512, 1024


# ---------------------------------------------------------------------------
# Helpers
# ---------------------------------------------------------------------------
def _round_up(x, m):
    return (x + m - 1) // m * m


def _pad_to(a, shape):
    pads = tuple((0, t - s) for s, t in zip(a.shape, shape))
    if all(p == (0, 0) for p in pads):
        return a
    return jnp.pad(a, pads)


def _largest_tile(dim, align, target):
    """Largest multiple of `align` that divides `dim` and is <= target.

    `dim` is already a multiple of `align` (the wrapper pads guarantee it), so
    a result always exists and no zero padding beyond the alignment pad is ever
    computed or transferred."""
    best = align
    t = align
    cap = min(target, dim)
    while t <= cap:
        if dim % t == 0:
            best = t
        t += align
    return best


# ---------------------------------------------------------------------------
# Kernel bodies
# ---------------------------------------------------------------------------
def _dot_nt(x, w):
    # x:[tm,tk] contracted with w:[tn,tk] on dim 1 of both operands (NT form),
    # so the torch-layout weight tile feeds the MXU without any transpose.
    return lax.dot_general(
        x, w,
        dimension_numbers=(((1,), (1,)), ((), ())),
        preferred_element_type=jnp.float32,
    )


def _kernel_single_k(x_ref, w_ref, b_ref, o_ref):
    # K fits in one tile: compute + bias + cast in one shot (no pl.when).
    o_ref[...] = (_dot_nt(x_ref[...], w_ref[...])
                  + b_ref[...].astype(jnp.float32)).astype(o_ref.dtype)


def _kernel_multi_k_f32out(x_ref, w_ref, b_ref, o_ref):
    # f32 output: accumulate straight into the resident output block (the out
    # BlockSpec returns the same (i, j) for every k) -- no scratch needed.
    k = pl.program_id(2)

    @pl.when(k == 0)
    def _():
        o_ref[...] = jnp.zeros_like(o_ref)

    o_ref[...] += _dot_nt(x_ref[...], w_ref[...])

    @pl.when(k == pl.num_programs(2) - 1)
    def _():
        o_ref[...] += b_ref[...].astype(jnp.float32)


def _kernel_multi_k_acc(x_ref, w_ref, b_ref, o_ref, acc_ref):
    # sub-f32 output: f32 VMEM accumulator + bias/cast epilogue on last K step.
    k = pl.program_id(2)

    @pl.when(k == 0)
    def _():
        acc_ref[...] = jnp.zeros_like(acc_ref)

    acc_ref[...] += _dot_nt(x_ref[...], w_ref[...])

    @pl.when(k == pl.num_programs(2) - 1)
    def _():
        o_ref[...] = (acc_ref[...] + b_ref[...].astype(jnp.float32)).astype(o_ref.dtype)


# Multi-head variants: the scalar-prefetched head index is consumed only by
# the index_maps; kernel bodies are identical to the single-head ones.
def _mh_kernel_single_k(idx_ref, x_ref, w_ref, b_ref, o_ref):
    del idx_ref
    _kernel_single_k(x_ref, w_ref, b_ref, o_ref)


def _mh_kernel_multi_k_f32out(idx_ref, x_ref, w_ref, b_ref, o_ref):
    del idx_ref
    _kernel_multi_k_f32out(x_ref, w_ref, b_ref, o_ref)


def _mh_kernel_multi_k_acc(idx_ref, x_ref, w_ref, b_ref, o_ref, acc_ref):
    del idx_ref
    _kernel_multi_k_acc(x_ref, w_ref, b_ref, o_ref, acc_ref)


# ---------------------------------------------------------------------------
# Parameter preparation (hoisted out of the hot path)
# ---------------------------------------------------------------------------
class LinearParams(NamedTuple):
    w: jax.Array   # [Np, Kp] or [H, Np, Kp]; torch [Fout, Fin] layout, padded
    b: jax.Array   # [1, Np]  or [H, 1, Np]; padded, original dtype
    fout: int
    fin: int


def prepare_linear_params(weight, bias, *, mxu_dtype=None):
    """Pad (and optionally cast) Linear parameters ONCE, outside the hot path.

    weight: [Fout, Fin] or [NUM_HEADS, Fout, Fin]  (torch layout, no transpose)
    bias:   [Fout]      or [NUM_HEADS, Fout]
    mxu_dtype: e.g. jnp.bfloat16 to feed the MXU bf16 operands (f32 acc kept).
    """
    multi = weight.ndim == 3
    fout, fin = weight.shape[-2], weight.shape[-1]
    np_, kp = _round_up(fout, 128), _round_up(fin, 128)
    if multi:
        h = weight.shape[0]
        w_p = _pad_to(weight, (h, np_, kp))
        b_p = _pad_to(bias.reshape(h, 1, fout), (h, 1, np_))
    else:
        w_p = _pad_to(weight, (np_, kp))
        b_p = _pad_to(bias.reshape(1, fout), (1, np_))
    if mxu_dtype is not None:
        w_p = w_p.astype(mxu_dtype)   # halves weight DMA bytes; bias stays f32
    return LinearParams(w=w_p, b=b_p, fout=fout, fin=fin)


# ---------------------------------------------------------------------------
# Forward
# ---------------------------------------------------------------------------
def linear_apply(x, params: LinearParams, idx=None, *, tm=_TM, tn=_TN, tk=_TK):
    """y = x @ W.T + b;  if params hold NUM_HEADS heads, `idx` selects the head
    (data-dependent, via scalar prefetch -- only that head's tiles are DMA'd)."""
    out_dtype = x.dtype
    B, fin = x.shape
    assert fin == params.fin
    multi = params.w.ndim == 3
    if multi:
        assert idx is not None, "Pass head idx in multi-headed mode."

    np_, kp = params.w.shape[-2], params.w.shape[-1]
    mxu_dtype = params.w.dtype
    # bf16 packs 16 sublanes per vreg, f32 packs 8.
    m_align = 16 if jnp.dtype(mxu_dtype).itemsize < 4 else 8
    mp = _round_up(B, m_align)

    tm = _largest_tile(mp, m_align, tm)
    tn = _largest_tile(np_, 128, tn)
    tk = _largest_tile(kp, 128, tk)
    gm, gn, gk = mp // tm, np_ // tn, kp // tk

    # v7x has 2 TensorCores; make sure at least one "parallel" axis has >= 2
    # blocks when there is non-trivial work, otherwise the second core idles.
    if gm == 1 and gn == 1 and mp * np_ * kp >= (1 << 24):
        if (np_ // 128) % 2 == 0:
            tn, gn = np_ // 2, 2
        elif (mp // m_align) % 2 == 0:
            tm, gm = mp // 2, 2

    x_p = _pad_to(x, (mp, kp))
    if x_p.dtype != mxu_dtype:
        x_p = x_p.astype(mxu_dtype)

    grid = (gm, gn, gk)

    # Kernel variant: no accumulator logic when K fits one tile; accumulate
    # directly into the resident f32 output block otherwise; only sub-f32
    # outputs need a scratch accumulator.
    scratch_shapes = []
    if gk == 1:
        body, mh_body = _kernel_single_k, _mh_kernel_single_k
    elif out_dtype == jnp.float32:
        body, mh_body = _kernel_multi_k_f32out, _mh_kernel_multi_k_f32out
    else:
        body, mh_body = _kernel_multi_k_acc, _mh_kernel_multi_k_acc
        scratch_shapes = [pltpu.VMEM((tm, tn), jnp.float32)]

    # NOTE: if a profile ever shows exposed DMA in the K steady state, add
    # pipeline_mode=pl.Buffered(3) to the x/w BlockSpecs below.
    if multi:
        kernel = mh_body
        num_prefetch = 1
        prefetch_args = (jnp.asarray(idx, jnp.int32).reshape(1),)
        x_spec = pl.BlockSpec((tm, tk), lambda i, j, k, idx_ref: (i, k))
        w_spec = pl.BlockSpec((pl.Squeezed(), tn, tk),
                              lambda i, j, k, idx_ref: (idx_ref[0], j, k))
        b_spec = pl.BlockSpec((pl.Squeezed(), 1, tn),
                              lambda i, j, k, idx_ref: (idx_ref[0], 0, j))
        o_spec = pl.BlockSpec((tm, tn), lambda i, j, k, idx_ref: (i, j))
    else:
        kernel = body
        num_prefetch = 0
        prefetch_args = ()
        x_spec = pl.BlockSpec((tm, tk), lambda i, j, k: (i, k))
        w_spec = pl.BlockSpec((tn, tk), lambda i, j, k: (j, k))
        b_spec = pl.BlockSpec((1, tn), lambda i, j, k: (0, j))
        o_spec = pl.BlockSpec((tm, tn), lambda i, j, k: (i, j))

    out = pl.pallas_call(
        kernel,
        out_shape=jax.ShapeDtypeStruct((mp, np_), out_dtype),
        grid_spec=pltpu.PrefetchScalarGridSpec(
            num_scalar_prefetch=num_prefetch,
            grid=grid,
            in_specs=[x_spec, w_spec, b_spec],
            out_specs=o_spec,
            scratch_shapes=scratch_shapes,
        ),
        compiler_params=pltpu.CompilerParams(
            dimension_semantics=("parallel", "parallel", "arbitrary"),
            vmem_limit_bytes=_VMEM_LIMIT,
        ),
    )(*prefetch_args, x_p, params.w, params.b)
    return out[:B, :params.fout]


# Convenience one-shot wrappers (prep + apply).  Prefer prepare_linear_params
# once + linear_apply in real use so parameter padding stays out of the loop.
def linear_single(x, weight, bias, *, mxu_dtype=None, **tile_kwargs):
    return linear_apply(x, prepare_linear_params(weight, bias, mxu_dtype=mxu_dtype),
                        **tile_kwargs)


def linear_multi_head(x, weights, biases, idx, *, mxu_dtype=None, **tile_kwargs):
    return linear_apply(x, prepare_linear_params(weights, biases, mxu_dtype=mxu_dtype),
                        idx=idx, **tile_kwargs)


# ---------------------------------------------------------------------------
# Deterministic parameter init (torch.nn.Linear default: U(-1/sqrt(fan_in), .))
# ---------------------------------------------------------------------------
def init_linear_params(key, fin, fout, dtype=jnp.float32):
    bound = 1.0 / (fin ** 0.5)
    kw, kb = jax.random.split(key)
    w = jax.random.uniform(kw, (fout, fin), dtype, minval=-bound, maxval=bound)
    b = jax.random.uniform(kb, (fout,), dtype, minval=-bound, maxval=bound)
    return w, b


if __name__ == "__main__":
    key = jax.random.PRNGKey(0)
    keys = jax.random.split(key, 10)

    # 1) module-scale single head: B=8, Fin=32, Fout=64 (single-block fast path)
    B, FIN, FOUT = 8, 32, 64
    x = jax.random.normal(keys[0], (B, FIN), jnp.float32)
    w, b = init_linear_params(keys[1], FIN, FOUT)
    params = prepare_linear_params(w, b)                 # padded once (hoisted)
    y = jax.block_until_ready(linear_apply(x, params))
    ref = x @ w.T + b
    assert y.shape == (B, FOUT)
    assert jnp.allclose(y, ref, atol=1e-5, rtol=1e-5)

    # 2) module-scale multi-head. torch builds ModuleList([lin] * NUM_CLASSES),
    #    i.e. all heads alias the SAME parameters -> broadcast. Only the
    #    selected head's tiles are ever DMA'd (scalar-prefetch index_map).
    weights = jnp.broadcast_to(w[None], (NUM_CLASSES, FOUT, FIN))
    biases = jnp.broadcast_to(b[None], (NUM_CLASSES, FOUT))
    mh_params = prepare_linear_params(weights, biases)   # padded once, reused
    y_mh = jax.block_until_ready(linear_apply(x, mh_params, idx=7))
    assert y_mh.shape == (B, FOUT)
    assert jnp.allclose(y_mh, ref, atol=1e-5, rtol=1e-5)

    # 3) f32 with K accumulation + non-pow2 Fout (divisor tiling, accumulate
    #    directly into o_ref): grid (1, 3, 2)
    B2, FIN2, FOUT2 = 128, 512, 384
    x2 = jax.random.normal(keys[2], (B2, FIN2), jnp.float32)
    w2, b2 = init_linear_params(keys[3], FIN2, FOUT2)
    p2 = prepare_linear_params(w2, b2)
    y2 = jax.block_until_ready(linear_apply(x2, p2, tn=128, tk=256))
    ref2 = x2 @ w2.T + b2
    assert jnp.allclose(y2, ref2, atol=2e-2, rtol=2e-2)

    # 4) bf16 MXU operands (f32 accumulation, f32 output) + megacore N split
    B3, FIN3, FOUT3 = 256, 1024, 512
    x3 = jax.random.normal(keys[4], (B3, FIN3), jnp.float32)
    w3, b3 = init_linear_params(keys[5], FIN3, FOUT3)
    p3 = prepare_linear_params(w3, b3, mxu_dtype=jnp.bfloat16)
    y3 = jax.block_until_ready(linear_apply(x3, p3))
    ref3 = jnp.dot(x3.astype(jnp.bfloat16), w3.astype(jnp.bfloat16).T,
                   preferred_element_type=jnp.float32) + b3
    assert jnp.allclose(y3, ref3, atol=2e-2, rtol=2e-2)

    # 5) multi-head with K accumulation (Fin=768 -> tk snaps to 256, grid gk=3)
    B4, FIN4, FOUT4 = 64, 768, 256
    x4 = jax.random.normal(keys[6], (B4, FIN4), jnp.float32)
    w4, b4 = init_linear_params(keys[7], FIN4, FOUT4)
    ws4 = jnp.broadcast_to(w4[None], (NUM_CLASSES, FOUT4, FIN4))
    bs4 = jnp.broadcast_to(b4[None], (NUM_CLASSES, FOUT4))
    p4 = prepare_linear_params(ws4, bs4)
    y4 = jax.block_until_ready(linear_apply(x4, p4, idx=31, tk=256))
    ref4 = x4 @ w4.T + b4
    assert jnp.allclose(y4, ref4, atol=2e-2, rtol=2e-2)

    # 6) bf16 input / bf16 output with K accumulation (f32 scratch + cast path)
    B5, FIN5, FOUT5 = 16, 256, 128
    x5 = jax.random.normal(keys[8], (B5, FIN5), jnp.float32).astype(jnp.bfloat16)
    w5f, b5f = init_linear_params(keys[9], FIN5, FOUT5)
    w5, b5 = w5f.astype(jnp.bfloat16), b5f.astype(jnp.bfloat16)
    p5 = prepare_linear_params(w5, b5)
    y5 = jax.block_until_ready(linear_apply(x5, p5, tk=128))
    ref5 = (jnp.dot(x5, w5.T, preferred_element_type=jnp.float32)
            + b5.astype(jnp.float32))
    assert jnp.allclose(y5.astype(jnp.float32), ref5, atol=5e-2, rtol=5e-2)

    print("KERNEL_OK")
</pallas_src>

<mosaic_0001>
module attributes {stable_mosaic.version = 11 : i64} {
  func.func @_kernel_single_k(%arg0: i32, %arg1: i32, %arg2: i32, %arg3: memref<8x128xf32, #tpu.memory_space<vmem>>, %arg4: memref<128x128xf32, #tpu.memory_space<vmem>>, %arg5: memref<1x128xf32, #tpu.memory_space<vmem>>, %arg6: memref<8x128xf32, #tpu.memory_space<vmem>>) attributes {dimension_semantics = [#tpu.dimension_semantics<parallel>, #tpu.dimension_semantics<parallel>, #tpu.dimension_semantics<arbitrary>], iteration_bounds = array<i64: 1, 1, 1>, scalar_prefetch = 0 : i64, scratch_operands = 0 : i64, tpu.core_type = #tpu.core_type<tc>, window_params = [{transform_indices = @transform_0, window_bounds = array<i64: 8, 128>}, {transform_indices = @transform_1, window_bounds = array<i64: 128, 128>}, {transform_indices = @transform_2, window_bounds = array<i64: 1, 128>}, {transform_indices = @transform_3, window_bounds = array<i64: 8, 128>}]} {
    %c0 = arith.constant 0 : index
    %c0_0 = arith.constant 0 : index
    %0 = vector.load %arg3[%c0, %c0_0] : memref<8x128xf32, #tpu.memory_space<vmem>>, vector<8x128xf32>
    %c0_1 = arith.constant 0 : index
    %c0_2 = arith.constant 0 : index
    %1 = vector.load %arg4[%c0_1, %c0_2] : memref<128x128xf32, #tpu.memory_space<vmem>>, vector<128x128xf32>
    %cst = arith.constant dense<0.000000e+00> : vector<8x128xf32>
    %2 = tpu.matmul %0, %1, %cst {dimension_numbers = #tpu.dot_dimension_numbers<[1], [1], [0], [0], [0, 0, 1, 0], [], []>} : vector<8x128xf32>, vector<128x128xf32>, vector<8x128xf32> -> vector<8x128xf32>
    %c0_3 = arith.constant 0 : index
    %c0_4 = arith.constant 0 : index
    %3 = vector.load %arg5[%c0_3, %c0_4] : memref<1x128xf32, #tpu.memory_space<vmem>>, vector<1x128xf32>
    %4 = vector.broadcast %3 : vector<1x128xf32> to vector<8x128xf32>
    %5 = arith.addf %2, %4 : vector<8x128xf32>
    %c0_5 = arith.constant 0 : index
    %c0_6 = arith.constant 0 : index
    %6 = vector.load %arg6[%c0_5, %c0_6] : memref<8x128xf32, #tpu.memory_space<vmem>>, vector<8x128xf32>
    tpu.vector_store %arg6[%c0_5, %c0_6], %5 {strides = array<i32>} : memref<8x128xf32, #tpu.memory_space<vmem>>, vector<8x128xf32>,
    return
  }
  func.func @transform_0(%arg0: i32, %arg1: i32, %arg2: i32) -> (i32, i32) {
    %c0_i32 = arith.constant 0 : i32
    return %arg0, %arg2 : i32, i32
  }
  func.func @transform_1(%arg0: i32, %arg1: i32, %arg2: i32) -> (i32, i32) {
    %c0_i32 = arith.constant 0 : i32
    return %arg1, %arg2 : i32, i32
  }
  func.func @transform_2(%arg0: i32, %arg1: i32, %arg2: i32) -> (i32, i32) {
    %c0_i32 = arith.constant 0 : i32
    %c0_i32_0 = arith.constant 0 : i32
    return %c0_i32, %arg1 : i32, i32
  }
  func.func @transform_3(%arg0: i32, %arg1: i32, %arg2: i32) -> (i32, i32) {
    %c0_i32 = arith.constant 0 : i32
    return %arg0, %arg1 : i32, i32
  }
}

</mosaic_0001>

<llo_original>
// kernel: tpu_custom_call.1
$region0: #{tpu_custom_call.1}
  #allocation0 [shape = 'u32[]', space=smem, size = 0x4, offset = 0x4, fixed_abs, tag = 'smem constant byte address 0x4 - core index']
  #allocation1 [shape = 'u32[144,128]{1,0:T(1,128)}', space=vmem, size = 0x12000, scoped, tag = 'internal scratch']
  %s0 = inlined_call_operand.hbm [shape: f32[8,128], index: 0, kind: input, shape index: {}]
  %s1 = inlined_call_operand.hbm [shape: f32[128,128], index: 1, kind: input, shape index: {}]
  %s2 = inlined_call_operand.vmem [shape: f32[1,128], index: 2, kind: input, shape index: {}]
  %s3 = inlined_call_operand.hbm [shape: f32[8,128], index: 3, kind: output, shape index: {}]
  %s4 = sld [smem:[#allocation0]]
  $region30: #{tpu_custom_call.1} parent=0
    _
  %s6 = ssub.s32 1, %s4
  %s7 = scalar_select 0, %s6, %s4
  $region1: #{tpu_custom_call.1} parent=0
    #allocation2 [shape = 'u8[4096]{0}', space=vmem, size = 0x1000, scoped, tag = 'input window, operand 0, single buffered']
    #allocation3 [shape = 's32[1]{0}', space=sflag, size = 0x4, scoped, tag = 'scoped memory for tpu_custom_call.1']
    #allocation4 [shape = 's32[1]{0}', space=sflag, size = 0x4, scoped, tag = 'scoped memory for tpu_custom_call.1']
    #allocation5 [shape = 'u8[65536]{0}', space=vmem, size = 0x10000, scoped, tag = 'input window, operand 1, single buffered']
    #allocation6 [shape = 's32[1]{0}', space=sflag, size = 0x4, scoped, tag = 'scoped memory for tpu_custom_call.1']
    #allocation7 [shape = 'u8[4096]{0}', space=vmem, size = 0x1000, scoped, tag = 'output window, operand 0, single buffered']
    %8 = vsyncpa [#allocation3], 0
    %9 = vsyncpa [#allocation6], 0
    %10 = vsyncpa [#allocation4], 0
    // Predicated region
    $region2: #{tpu_custom_call.1} parent=1 // pred_check
      _
    $region3: #{tpu_custom_call.1} parent=1 // pred_check_branch
      %12 = sbr.rel (0) target = $region5
    $region4: #{tpu_custom_call.1} parent=1 // pred_region
      %s14 = ssub.s32 128, 128
      %15 = vsyncadd [#allocation3], %s14
      %s17 = sshll.u32 [#allocation2], 4
      %s18 = int_to_ptr.vmem [resolvable:$true] %s17
      %20 = dma.hbm_to_vmem [thread:$0]  %s0, 128, %s18, [#allocation3]
    $region5: #{tpu_custom_call.1} parent=1 // pred_fallthru
      _
    // Predicated region
    $region6: #{tpu_custom_call.1} parent=1 // pred_check
      _
    $region7: #{tpu_custom_call.1} parent=1 // pred_check_branch
      %22 = sbr.rel (0) target = $region9
    $region8: #{tpu_custom_call.1} parent=1 // pred_region
      %s24 = ssub.s32 2048, 2048
      %25 = vsyncadd [#allocation6], %s24
      %s26 = sshll.u32 [#allocation5], 4
      %s27 = int_to_ptr.vmem [resolvable:$true] %s26
      %32 = dma.hbm_to_vmem [thread:$0]  %s1, 2048, %s27, [#allocation6], 128, 128, 8
    $region9: #{tpu_custom_call.1} parent=1 // pred_fallthru
      _
    // Predicated region
    $region10: #{tpu_custom_call.1} parent=1 // pred_check
      _
    $region11: #{tpu_custom_call.1} parent=1 // pred_check_branch
      %34 = sbr.rel (0) target = $region13
    $region12: #{tpu_custom_call.1} parent=1 // pred_region
      _
    $region13: #{tpu_custom_call.1} parent=1 // pred_fallthru
      _
    // Predicated region
    $region14: #{tpu_custom_call.1} parent=1 // pred_check
      _
    $region15: #{tpu_custom_call.1} parent=1 // pred_check_branch
      %36 = sbr.rel (0) target = $region17
    $region16: #{tpu_custom_call.1} parent=1 // pred_region
      %37 = dma.done [#allocation3], 128
    $region17: #{tpu_custom_call.1} parent=1 // pred_fallthru
      _
    // Predicated region
    $region18: #{tpu_custom_call.1} parent=1 // pred_check
      _
    $region19: #{tpu_custom_call.1} parent=1 // pred_check_branch
      %39 = sbr.rel (0) target = $region21
    $region20: #{tpu_custom_call.1} parent=1 // pred_region
      %40 = dma.done [#allocation6], 2048
    $region21: #{tpu_custom_call.1} parent=1 // pred_fallthru
      _
    %v41 = vld [vmem:[#allocation2] sm:$0xff]
    %v42 = vld [vmem:[#allocation5] sm:$0xff]
    %v43 = vld [vmem:[#allocation5 + $0x8] sm:$0xff]
    %v44 = vld [vmem:[#allocation5 + $0x10] sm:$0xff]
    %v45 = vld [vmem:[#allocation5 + $0x18] sm:$0xff]
    %v46 = vld [vmem:[#allocation5 + $0x20] sm:$0xff]
    %v47 = vld [vmem:[#allocation5 + $0x28] sm:$0xff]
    %v48 = vld [vmem:[#allocation5 + $0x30] sm:$0xff]
    %v49 = vld [vmem:[#allocation5 + $0x38] sm:$0xff]
    %v50 = vld [vmem:[#allocation5 + $0x40] sm:$0xff]
    %v51 = vld [vmem:[#allocation5 + $0x48] sm:$0xff]
    %v52 = vld [vmem:[#allocation5 + $0x50] sm:$0xff]
    %v53 = vld [vmem:[#allocation5 + $0x58] sm:$0xff]
    %v54 = vld [vmem:[#allocation5 + $0x60] sm:$0xff]
    %v55 = vld [vmem:[#allocation5 + $0x68] sm:$0xff]
    %v56 = vld [vmem:[#allocation5 + $0x70] sm:$0xff]
    %v57 = vld [vmem:[#allocation5 + $0x78] sm:$0xff]
    %v58 = vld [vmem:[%s2] sm:$0x1]
    %v60 = vlaneseq
    %v61 = vshrl.u32 %v60, 7
    %v62 = vsub.s32 0, %v61
    %v63 = vrot.slane %v58, %v62
    %65 = vmatprep.subr.mxu0 0.0
    %66 = vmatpush1.xpose.msra.mxu0 %v57
    %67 = vmatprep.subr.mxu0 0.0
    %68 = vmatpush1.xpose.msra.mxu0 %v56
    %69 = vmatprep.subr.mxu0 0.0
    %70 = vmatpush1.xpose.msra.mxu0 %v55
    %71 = vmatprep.subr.mxu0 0.0
    %72 = vmatpush1.xpose.msra.mxu0 %v54
    %73 = vmatprep.subr.mxu0 0.0
    %74 = vmatpush1.xpose.msra.mxu0 %v53
    %75 = vmatprep.subr.mxu0 0.0
    %76 = vmatpush1.xpose.msra.mxu0 %v52
    %77 = vmatprep.subr.mxu0 0.0
    %78 = vmatpush1.xpose.msra.mxu0 %v51
    %79 = vmatprep.subr.mxu0 0.0
    %80 = vmatpush1.xpose.msra.mxu0 %v50
    %81 = vmatprep.subr.mxu0 0.0
    %82 = vmatpush1.xpose.msra.mxu0 %v49
    %83 = vmatprep.subr.mxu0 0.0
    %84 = vmatpush1.xpose.msra.mxu0 %v48
    %85 = vmatprep.subr.mxu0 0.0
    %86 = vmatpush1.xpose.msra.mxu0 %v47
    %87 = vmatprep.subr.mxu0 0.0
    %88 = vmatpush1.xpose.msra.mxu0 %v46
    %89 = vmatprep.subr.mxu0 0.0
    %90 = vmatpush1.xpose.msra.mxu0 %v45
    %91 = vmatprep.subr.mxu0 0.0
    %92 = vmatpush1.xpose.msra.mxu0 %v44
    %93 = vmatprep.subr.mxu0 0.0
    %94 = vmatpush1.xpose.msra.mxu0 %v43
    %95 = vmatprep.subr.mxu0 0.0
    %96 = vmatpush1.xpose.msra.mxu0 %v42
    %97 = vmatprep.subr.mxu0 0.0
    %98 = vmatpush2.xpose.msra.mxu0 0.0
    %99 = vmatprep.subr.mxu0 0.0
    %100 = vmatpush2.xpose.msra.mxu0 0.0
    %101 = vmatprep.subr.mxu0 0.0
    %102 = vmatpush2.xpose.msra.mxu0 0.0
    %103 = vmatprep.subr.mxu0 0.0
    %104 = vmatpush2.xpose.msra.mxu0 0.0
    %105 = vmatprep.subr.mxu0 0.0
    %106 = vmatpush2.xpose.msra.mxu0 0.0
    %107 = vmatprep.subr.mxu0 0.0
    %108 = vmatpush2.xpose.msra.mxu0 0.0
    %109 = vmatprep.subr.mxu0 0.0
    %110 = vmatpush2.xpose.msra.mxu0 0.0
    %111 = vmatprep.subr.mxu0 0.0
    %112 = vmatpush2.xpose.msra.mxu0 0.0
    %113 = vmatprep.subr.mxu0 0.0
    %114 = vmatpush2.xpose.msra.mxu0 0.0
    %115 = vmatprep.subr.mxu0 0.0
    %116 = vmatpush2.xpose.msra.mxu0 0.0
    %117 = vmatprep.subr.mxu0 0.0
    %118 = vmatpush2.xpose.msra.mxu0 0.0
    %119 = vmatprep.subr.mxu0 0.0
    %120 = vmatpush2.xpose.msra.mxu0 0.0
    %121 = vmatprep.subr.mxu0 0.0
    %122 = vmatpush2.xpose.msra.mxu0 0.0
    %123 = vmatprep.subr.mxu0 0.0
    %124 = vmatpush2.xpose.msra.mxu0 0.0
    %125 = vmatprep.subr.mxu0 0.0
    %126 = vmatpush2.xpose.msra.mxu0 0.0
    %127 = vmatprep.subr.mxu0 0.0
    %128 = vmatpush2.xpose.msra.mxu0 0.0
    %129 = vmatprep.mubr.f32.mxu0 0.0
    %130 = vmatmul.mubr.f32.gmra.mxu0 %v41
    %v131 = vpop.f32.mrf.mxu0
    %v132 = vadd.f32 %v63, %v131
    %v133 = vpop.f32.mrf.mxu0
    %134 = vdwg.mxu0
    %135 = vst [vmem:[#allocation7] sm:$0xff] %v132
    // Predicated region
    $region22: #{tpu_custom_call.1} parent=1 // pred_check
      _
    $region23: #{tpu_custom_call.1} parent=1 // pred_check_branch
      %137 = sbr.rel (0) target = $region25
    $region24: #{tpu_custom_call.1} parent=1 // pred_region
      %s139 = ssub.s32 128, 128
      %140 = vsyncadd [#allocation4], %s139
      %s142 = sshll.u32 [#allocation7], 4
      %s143 = int_to_ptr.vmem [resolvable:$true] %s142
      %145 = dma.vmem_to_hbm [thread:$0]  %s143, 128, %s3, [#allocation4]
    $region25: #{tpu_custom_call.1} parent=1 // pred_fallthru
      _
    // Predicated region
    $region26: #{tpu_custom_call.1} parent=1 // pred_check
      _
    $region27: #{tpu_custom_call.1} parent=1 // pred_check_branch
      %147 = sbr.rel (0) target = $region29
    $region28: #{tpu_custom_call.1} parent=1 // pred_region
      %148 = dma.done [#allocation4], 128
    $region29: #{tpu_custom_call.1} parent=1 // pred_fallthru
      _
    %149 = vsyncpa [#allocation3], 1
    %150 = vsyncpa [#allocation6], 1
    %151 = vsyncpa [#allocation4], 1

</llo_original>
